<compile_context>
chip_gen: v6e
topology: v6e:2x2x1
jax: 0.10.0
libtpu: 0.0.40
codegen_flags: <defaults>
</compile_context>

<pallas_src>
import functools

import jax
import jax.numpy as jnp
from jax.experimental import pallas as pl
from jax.experimental.pallas import tpu as pltpu

_LANE = 128
_SUBLANE = 8
_TARGET_TILE_BYTES = 8 << 20          # upper bound on the per-tile VMEM footprint target


def _round_up(x, m):
    return ((x + m - 1) // m) * m


def _pick_vmem_limit():
    """Generation-aware VMEM budget: ~3/4 of physical (v7x: 64 MiB -> 48; v5e/v6e: 128 -> 96)."""
    try:
        cap = pltpu.get_tpu_info().vmem_capacity_bytes
    except Exception:
        cap = None
    if not cap:
        cap = 64 * 1024 * 1024
    return int(cap) * 3 // 4


def _choose_batch_tile(B, dim, itemsize, vmem_limit, batch_tile):
    """Pick the batch-tile row count.

    The VMEM footprint per row accounts for (8,128) lane padding (dim rounded up to 128) and the
    f32 upcast temporaries (z0, result), so small-dim cases don't blow the VMEM limit.
    """
    if batch_tile is not None:
        tile = min(int(batch_tile), B)
        if tile < B:
            assert tile % _SUBLANE == 0, f"batch_tile={batch_tile} must be a multiple of {_SUBLANE}"
        return max(tile, 1)
    if B <= _SUBLANE:
        return B
    # Footprint per row: 4x double-buffered in/out blocks + ~2x f32 temporaries -> /8 of limit.
    row_vmem = _round_up(dim, _LANE) * max(itemsize, 4)
    budget = min(_TARGET_TILE_BYTES, max(vmem_limit // 8, 1 << 20))
    rows = max(_SUBLANE, (budget // row_vmem) // _SUBLANE * _SUBLANE)
    if rows >= B:
        if B >= 4 * _SUBLANE:
            # Big enough to split: force >= 2 grid steps so both v7x TensorCores get work.
            rows = _round_up(pl.cdiv(B, 2), _SUBLANE)
        else:
            rows = B
    return rows


# ------------------------------------------------------------------------------------- kernel


def _planar_flows_kernel(z_ref, wt_ref, s_ref, cs_ref, b_ref, o_ref, *, num_flows):
    """Apply all `num_flows` planar flows to one (TB, dim) batch tile.

    z_ref/o_ref: (TB, dim) I/O tile (any float dtype; compute is f32)
    wt_ref:      (dim, Lp) f32 weights, transposed  (resident across the grid)
    s_ref:       (Lp, dim) f32 scales               (resident)
    cs_ref:      (Lp, Lp)  f32 strictly-upper coupling matrix C[j, m] = s_j . w_m (m > j)
    b_ref:       (1, Lp)   f32 biases
    """
    z0 = z_ref[...].astype(jnp.float32)                                   # (TB, dim), loaded once
    # All flow pre-activations at once on the MXU: (TB, dim) @ (dim, Lp) + bias row.
    a = jnp.dot(z0, wt_ref[...], preferred_element_type=jnp.float32) + b_ref[...]   # (TB, Lp)
    cs = cs_ref[...]                                                      # (Lp, Lp), tiny
    # Forward-substitute the flow recursion on the tiny (TB, Lp) activation matrix.
    # Row l of `cs` is zero at columns <= l, so earlier columns are never perturbed.
    for l in range(num_flows - 1):
        t_l = jnp.tanh(a[:, l:l + 1])                                     # (TB, 1)
        a = a + t_l * cs[l:l + 1, :]                                      # rank-1 VPU update
    t = jnp.tanh(a)                                                       # (TB, Lp): all tanh(a_l)
    # Apply every flow's z-update with ONE MXU matmul instead of L full-width VPU updates.
    upd = jnp.dot(t, s_ref[...], preferred_element_type=jnp.float32)      # (TB, dim)
    o_ref[...] = (z0 + upd).astype(o_ref.dtype)


# ------------------------------------------------------------------------------------ wrapper


def planar_flows(z, weights, biases, scales, *, batch_tile=None, donate_z=True):
    """Sequentially apply L planar flows:  z <- z + scale_l * tanh(z @ w_l + b_l).

    z: (B, dim); weights, scales: (L, dim); biases: (L,) or (L, 1).
    L = 1 is exactly the PyTorch PlanarFlow.forward.

    donate_z aliases the z input with the output; it is a true in-place update when the caller
    donates z into a surrounding jit (otherwise XLA may insert a defensive copy).
    """
    B, dim = z.shape
    L, wd = weights.shape
    assert wd == dim and scales.shape == (L, dim), "parameter shapes must be (L, dim)"

    # Hoist all parameter casts out of the kernel (tiny, resident, done once).
    w32 = jnp.asarray(weights, jnp.float32)
    s32 = jnp.asarray(scales, jnp.float32)
    b32 = jnp.asarray(biases, jnp.float32).reshape(L)

    # Pad the flow axis to a multiple of 8: zero-parameter planar flows are exact identities.
    lp = _round_up(max(L, _SUBLANE), _SUBLANE)
    if lp != L:
        w32 = jnp.pad(w32, ((0, lp - L), (0, 0)))
        s32 = jnp.pad(s32, ((0, lp - L), (0, 0)))
        b32 = jnp.pad(b32, ((0, lp - L),))

    wt = w32.T                                                            # (dim, Lp)
    c = s32 @ wt                                                          # (Lp, Lp): C[j,m] = s_j.w_m
    cs = jnp.where(jnp.arange(lp)[:, None] < jnp.arange(lp)[None, :], c, 0.0)   # strictly upper
    b_row = b32[None, :]                                                  # (1, Lp)

    itemsize = jnp.dtype(z.dtype).itemsize
    vmem_limit = _pick_vmem_limit()
    tb = _choose_batch_tile(B, dim, itemsize, vmem_limit, batch_tile)
    grid = (pl.cdiv(B, tb),)                                              # tail tile masked by Pallas

    cost = pl.CostEstimate(
        flops=int(4 * B * dim * L + 3 * B * L * L + B * dim),
        transcendentals=int(2 * B * L),
        bytes_accessed=int(2 * B * dim * itemsize + (2 * lp * dim + lp * lp + lp) * 4),
    )
    kernel = functools.partial(_planar_flows_kernel, num_flows=L)

    return pl.pallas_call(
        kernel,
        out_shape=jax.ShapeDtypeStruct((B, dim), z.dtype),
        grid=grid,
        in_specs=[
            pl.BlockSpec((tb, dim), lambda i: (i, 0)),    # z tile
            pl.BlockSpec((dim, lp), lambda i: (0, 0)),    # W^T  (resident)
            pl.BlockSpec((lp, dim), lambda i: (0, 0)),    # S    (resident)
            pl.BlockSpec((lp, lp), lambda i: (0, 0)),     # strictly-upper C (resident)
            pl.BlockSpec((1, lp), lambda i: (0, 0)),      # biases
        ],
        out_specs=pl.BlockSpec((tb, dim), lambda i: (i, 0)),
        input_output_aliases=({0: 0} if donate_z else {}),
        compiler_params=pltpu.CompilerParams(
            dimension_semantics=("parallel",),            # megacore-shard the batch axis
            vmem_limit_bytes=vmem_limit,
        ),
        cost_estimate=cost,
    )(z, wt, s32, cs, b_row)


def planar_flows_ref(z, weights, biases, scales):
    """Pure-JAX reference matching the PyTorch forward (applied L times sequentially)."""
    z = jnp.asarray(z, jnp.float32)
    w = jnp.asarray(weights, jnp.float32)
    s = jnp.asarray(scales, jnp.float32)
    b = jnp.asarray(biases, jnp.float32).reshape(-1)
    for l in range(w.shape[0]):
        act = z @ w[l][:, None] + b[l]
        z = z + s[l][None, :] * jnp.tanh(act)
    return z


# --------------------------------------------------------------------------------------- demo

if __name__ == "__main__":
    root = jax.random.PRNGKey(0)

    def run_case(batch, dim, flow_length, dtype=jnp.float32, batch_tile=None, tol=1e-5):
        key = jax.random.fold_in(root, batch * 100003 + dim * 131 + flow_length)
        kz, kw, kb, ks = jax.random.split(key, 4)
        # Parameter init mirroring reset_parameters(): U(-0.01, 0.01)
        weights = jax.random.uniform(kw, (flow_length, dim), jnp.float32, -0.01, 0.01)
        biases = jax.random.uniform(kb, (flow_length, 1), jnp.float32, -0.01, 0.01)
        scales = jax.random.uniform(ks, (flow_length, dim), jnp.float32, -0.01, 0.01)
        z = jax.random.normal(kz, (batch, dim), jnp.float32).astype(dtype)

        ref = planar_flows_ref(z, weights, biases, scales)          # computed before the kernel
        out = planar_flows(z, weights, biases, scales, batch_tile=batch_tile)
        out = jax.block_until_ready(out)
        assert out.shape == (batch, dim) and out.dtype == dtype
        assert jnp.allclose(out.astype(jnp.float32), ref, atol=tol, rtol=tol), (
            f"mismatch vs reference for case {(batch, dim, flow_length, dtype)}")

    # Single PlanarFlow (exactly the PyTorch module), small dim.
    run_case(batch=8, dim=16, flow_length=1)
    # Stack of 4 flows, small dim.
    run_case(batch=8, dim=16, flow_length=4)
    # Multi-step grid with a masked (partially out-of-bounds) tail tile, no wrapper pad/slice.
    run_case(batch=200, dim=16, flow_length=4)
    # Lane-aligned dim: both MXU matmuls at full lane width.
    run_case(batch=16, dim=128, flow_length=3)
    # Deeper stack: same restructured kernel, no separate deep path needed.
    run_case(batch=16, dim=128, flow_length=6)
    # bf16 I/O path (half the streamed HBM bytes; compute stays f32 in-kernel).
    run_case(batch=64, dim=64, flow_length=2, dtype=jnp.bfloat16, tol=2e-2)
    # Explicit batch_tile with a non-divisible batch (masked tail tile).
    run_case(batch=40, dim=24, flow_length=5, batch_tile=16)

    print("KERNEL_OK")
</pallas_src>

<mosaic_0001>
module attributes {stable_mosaic.version = 11 : i64} {
  func.func @_planar_flows_kernel(%arg0: i32, %arg1: memref<8x16xf32, #tpu.memory_space<vmem>>, %arg2: memref<16x8xf32, #tpu.memory_space<vmem>>, %arg3: memref<8x16xf32, #tpu.memory_space<vmem>>, %arg4: memref<8x8xf32, #tpu.memory_space<vmem>>, %arg5: memref<1x8xf32, #tpu.memory_space<vmem>>, %arg6: memref<8x16xf32, #tpu.memory_space<vmem>>) attributes {dimension_semantics = [#tpu.dimension_semantics<parallel>], iteration_bounds = array<i64: 1>, scalar_prefetch = 0 : i64, scratch_operands = 0 : i64, tpu.core_type = #tpu.core_type<tc>, window_params = [{transform_indices = @transform_0, window_bounds = array<i64: 8, 16>}, {pipeline_mode = #tpu.pipeline_mode<synchronous>, transform_indices = @transform_1, window_bounds = array<i64: 16, 8>}, {pipeline_mode = #tpu.pipeline_mode<synchronous>, transform_indices = @transform_2, window_bounds = array<i64: 8, 16>}, {pipeline_mode = #tpu.pipeline_mode<synchronous>, transform_indices = @transform_3, window_bounds = array<i64: 8, 8>}, {pipeline_mode = #tpu.pipeline_mode<synchronous>, transform_indices = @transform_4, window_bounds = array<i64: 1, 8>}, {transform_indices = @transform_5, window_bounds = array<i64: 8, 16>}]} {
    %c0 = arith.constant 0 : index
    %c0_0 = arith.constant 0 : index
    %0 = vector.load %arg1[%c0, %c0_0] : memref<8x16xf32, #tpu.memory_space<vmem>>, vector<8x16xf32>
    %c0_1 = arith.constant 0 : index
    %c0_2 = arith.constant 0 : index
    %1 = vector.load %arg2[%c0_1, %c0_2] : memref<16x8xf32, #tpu.memory_space<vmem>>, vector<16x8xf32>
    %cst = arith.constant dense<0.000000e+00> : vector<8x8xf32>
    %2 = tpu.matmul %0, %1, %cst {dimension_numbers = #tpu.dot_dimension_numbers<[1], [0], [0], [1], [0, 0, 1, 1], [], []>} : vector<8x16xf32>, vector<16x8xf32>, vector<8x8xf32> -> vector<8x8xf32>
    %c0_3 = arith.constant 0 : index
    %c0_4 = arith.constant 0 : index
    %3 = vector.load %arg5[%c0_3, %c0_4] : memref<1x8xf32, #tpu.memory_space<vmem>>, vector<1x8xf32>
    %4 = vector.broadcast %3 : vector<1x8xf32> to vector<8x8xf32>
    %5 = arith.addf %2, %4 : vector<8x8xf32>
    %6 = math.tanh %5 : vector<8x8xf32>
    %c0_5 = arith.constant 0 : index
    %c0_6 = arith.constant 0 : index
    %7 = vector.load %arg3[%c0_5, %c0_6] : memref<8x16xf32, #tpu.memory_space<vmem>>, vector<8x16xf32>
    %cst_7 = arith.constant dense<0.000000e+00> : vector<8x16xf32>
    %8 = tpu.matmul %6, %7, %cst_7 {dimension_numbers = #tpu.dot_dimension_numbers<[1], [0], [0], [1], [0, 0, 1, 1], [], []>} : vector<8x8xf32>, vector<8x16xf32>, vector<8x16xf32> -> vector<8x16xf32>
    %9 = arith.addf %0, %8 : vector<8x16xf32>
    %c0_8 = arith.constant 0 : index
    %c0_9 = arith.constant 0 : index
    %10 = vector.load %arg6[%c0_8, %c0_9] : memref<8x16xf32, #tpu.memory_space<vmem>>, vector<8x16xf32>
    tpu.vector_store %arg6[%c0_8, %c0_9], %9 {strides = array<i32>} : memref<8x16xf32, #tpu.memory_space<vmem>>, vector<8x16xf32>,
    return
  }
  func.func @transform_0(%arg0: i32) -> (i32, i32) {
    %c0_i32 = arith.constant 0 : i32
    %c0_i32_0 = arith.constant 0 : i32
    return %arg0, %c0_i32 : i32, i32
  }
  func.func @transform_1(%arg0: i32) -> (i32, i32) {
    %c0_i32 = arith.constant 0 : i32
    %c0_i32_0 = arith.constant 0 : i32
    %c0_i32_1 = arith.constant 0 : i32
    return %c0_i32, %c0_i32_0 : i32, i32
  }
  func.func @transform_2(%arg0: i32) -> (i32, i32) {
    %c0_i32 = arith.constant 0 : i32
    %c0_i32_0 = arith.constant 0 : i32
    %c0_i32_1 = arith.constant 0 : i32
    return %c0_i32, %c0_i32_0 : i32, i32
  }
  func.func @transform_3(%arg0: i32) -> (i32, i32) {
    %c0_i32 = arith.constant 0 : i32
    %c0_i32_0 = arith.constant 0 : i32
    %c0_i32_1 = arith.constant 0 : i32
    return %c0_i32, %c0_i32_0 : i32, i32
  }
  func.func @transform_4(%arg0: i32) -> (i32, i32) {
    %c0_i32 = arith.constant 0 : i32
    %c0_i32_0 = arith.constant 0 : i32
    %c0_i32_1 = arith.constant 0 : i32
    return %c0_i32, %c0_i32_0 : i32, i32
  }
  func.func @transform_5(%arg0: i32) -> (i32, i32) {
    %c0_i32 = arith.constant 0 : i32
    %c0_i32_0 = arith.constant 0 : i32
    return %arg0, %c0_i32 : i32, i32
  }
}

</mosaic_0001>

<llo_original>
// kernel: tpu_custom_call.1
$region0: #{tpu_custom_call.1}
  #allocation0 [shape = 'u32[]', space=smem, size = 0x4, offset = 0x4, fixed_abs, tag = 'smem constant byte address 0x4 - core index']
  #allocation1 [shape = 'u32[144,128]{1,0:T(1,128)}', space=vmem, size = 0x12000, scoped, tag = 'internal scratch']
  %s0 = inlined_call_operand.hbm [shape: f32[8,16], index: 0, kind: input, shape index: {}, may-alias: {0,5}]
  %s1 = inlined_call_operand.vmem [shape: f32[16,8], index: 1, kind: input, shape index: {}]
  %s2 = inlined_call_operand.vmem [shape: f32[8,16], index: 2, kind: input, shape index: {}]
  %s3 = inlined_call_operand.vmem [shape: f32[8,8], index: 3, kind: input, shape index: {}]
  %s4 = inlined_call_operand.vmem [shape: f32[1,8], index: 4, kind: input, shape index: {}]
  %s5 = inlined_call_operand.hbm [shape: f32[8,16], index: 5, kind: output, shape index: {}, may-alias: {0,5}]
  %s6 = sld [smem:[#allocation0]]
  $region34: #{tpu_custom_call.1} parent=0
    _
  %s8 = ssub.s32 1, %s6
  %s9 = scalar_select 0, %s8, %s6
  $region1: #{tpu_custom_call.1} parent=0
    #allocation2 [shape = 'u8[4096]{0}', space=vmem, size = 0x1000, scoped, tag = 'input window, operand 0, single buffered']
    #allocation3 [shape = 's32[1]{0}', space=sflag, size = 0x4, scoped, tag = 'scoped memory for tpu_custom_call.1']
    #allocation4 [shape = 's32[1]{0}', space=sflag, size = 0x4, scoped, tag = 'scoped memory for tpu_custom_call.1']
    #allocation5 [shape = 'u8[4096]{0}', space=vmem, size = 0x1000, scoped, tag = 'output window, operand 0, single buffered']
    %10 = vsyncpa [#allocation3], 0
    %11 = vsyncpa [#allocation4], 0
    // Predicated region
    $region2: #{tpu_custom_call.1} parent=1 // pred_check
      _
    $region3: #{tpu_custom_call.1} parent=1 // pred_check_branch
      %13 = sbr.rel (0) target = $region5
    $region4: #{tpu_custom_call.1} parent=1 // pred_region
      %s15 = ssub.s32 128, 128
      %16 = vsyncadd [#allocation3], %s15
      %s18 = sshll.u32 [#allocation2], 4
      %s19 = int_to_ptr.vmem [resolvable:$true] %s18
      %21 = dma.hbm_to_vmem [thread:$0]  %s0, 128, %s19, [#allocation3]
    $region5: #{tpu_custom_call.1} parent=1 // pred_fallthru
      _
    // Predicated region
    $region6: #{tpu_custom_call.1} parent=1 // pred_check
      _
    $region7: #{tpu_custom_call.1} parent=1 // pred_check_branch
      %23 = sbr.rel (0) target = $region9
    $region8: #{tpu_custom_call.1} parent=1 // pred_region
      _
    $region9: #{tpu_custom_call.1} parent=1 // pred_fallthru
      _
    // Predicated region
    $region10: #{tpu_custom_call.1} parent=1 // pred_check
      _
    $region11: #{tpu_custom_call.1} parent=1 // pred_check_branch
      %25 = sbr.rel (0) target = $region13
    $region12: #{tpu_custom_call.1} parent=1 // pred_region
      _
    $region13: #{tpu_custom_call.1} parent=1 // pred_fallthru
      _
    // Predicated region
    $region14: #{tpu_custom_call.1} parent=1 // pred_check
      _
    $region15: #{tpu_custom_call.1} parent=1 // pred_check_branch
      %27 = sbr.rel (0) target = $region17
    $region16: #{tpu_custom_call.1} parent=1 // pred_region
      _
    $region17: #{tpu_custom_call.1} parent=1 // pred_fallthru
      _
    // Predicated region
    $region18: #{tpu_custom_call.1} parent=1 // pred_check
      _
    $region19: #{tpu_custom_call.1} parent=1 // pred_check_branch
      %29 = sbr.rel (0) target = $region21
    $region20: #{tpu_custom_call.1} parent=1 // pred_region
      _
    $region21: #{tpu_custom_call.1} parent=1 // pred_fallthru
      _
    // Predicated region
    $region22: #{tpu_custom_call.1} parent=1 // pred_check
      _
    $region23: #{tpu_custom_call.1} parent=1 // pred_check_branch
      %31 = sbr.rel (0) target = $region25
    $region24: #{tpu_custom_call.1} parent=1 // pred_region
      %32 = dma.done [#allocation3], 128
    $region25: #{tpu_custom_call.1} parent=1 // pred_fallthru
      _
    %v33 = vld [vmem:[#allocation2] sm:$0xff]
    %v34 = vld [vmem:[%s1] sm:$0xff]
    %v35 = vld [vmem:[%s1 + $0x8] sm:$0xff]
    %v36 = vld [vmem:[%s4] sm:$0x1]
    %v38 = vlaneseq
    %v39 = vshrl.u32 %v38, 7
    %v40 = vsub.s32 0, %v39
    %v41 = vrot.slane %v36, %v40
    %vm43 = vcmask 130048
    %v45 = vsel %vm43, %v33, 0
    %47 = vmatprep.subr.mxu0 0.0
    %48 = vmatpush1.msra.mxu0 0.0
    %49 = vmatprep.subr.mxu0 0.0
    %50 = vmatpush1.msra.mxu0 0.0
    %51 = vmatprep.subr.mxu0 0.0
    %52 = vmatpush1.msra.mxu0 0.0
    %53 = vmatprep.subr.mxu0 0.0
    %54 = vmatpush1.msra.mxu0 0.0
    %55 = vmatprep.subr.mxu0 0.0
    %56 = vmatpush1.msra.mxu0 0.0
    %57 = vmatprep.subr.mxu0 0.0
    %58 = vmatpush1.msra.mxu0 0.0
    %59 = vmatprep.subr.mxu0 0.0
    %60 = vmatpush1.msra.mxu0 0.0
    %61 = vmatprep.subr.mxu0 0.0
    %62 = vmatpush1.msra.mxu0 0.0
    %63 = vmatprep.subr.mxu0 0.0
    %64 = vmatpush1.msra.mxu0 0.0
    %65 = vmatprep.subr.mxu0 0.0
    %66 = vmatpush1.msra.mxu0 0.0
    %67 = vmatprep.subr.mxu0 0.0
    %68 = vmatpush1.msra.mxu0 0.0
    %69 = vmatprep.subr.mxu0 0.0
    %70 = vmatpush1.msra.mxu0 0.0
    %71 = vmatprep.subr.mxu0 0.0
    %72 = vmatpush1.msra.mxu0 0.0
    %73 = vmatprep.subr.mxu0 0.0
    %74 = vmatpush1.msra.mxu0 0.0
    %75 = vmatprep.subr.mxu0 0.0
    %76 = vmatpush1.msra.mxu0 %v35
    %77 = vmatprep.subr.mxu0 0.0
    %78 = vmatpush1.msra.mxu0 %v34
    %79 = vmatprep.subr.mxu0 0.0
    %80 = vmatpush2.msra.mxu0 0.0
    %81 = vmatprep.subr.mxu0 0.0
    %82 = vmatpush2.msra.mxu0 0.0
    %83 = vmatprep.subr.mxu0 0.0
    %84 = vmatpush2.msra.mxu0 0.0
    %85 = vmatprep.subr.mxu0 0.0
    %86 = vmatpush2.msra.mxu0 0.0
    %87 = vmatprep.subr.mxu0 0.0
    %88 = vmatpush2.msra.mxu0 0.0
    %89 = vmatprep.subr.mxu0 0.0
    %90 = vmatpush2.msra.mxu0 0.0
    %91 = vmatprep.subr.mxu0 0.0
    %92 = vmatpush2.msra.mxu0 0.0
    %93 = vmatprep.subr.mxu0 0.0
    %94 = vmatpush2.msra.mxu0 0.0
    %95 = vmatprep.subr.mxu0 0.0
    %96 = vmatpush2.msra.mxu0 0.0
    %97 = vmatprep.subr.mxu0 0.0
    %98 = vmatpush2.msra.mxu0 0.0
    %99 = vmatprep.subr.mxu0 0.0
    %100 = vmatpush2.msra.mxu0 0.0
    %101 = vmatprep.subr.mxu0 0.0
    %102 = vmatpush2.msra.mxu0 0.0
    %103 = vmatprep.subr.mxu0 0.0
    %104 = vmatpush2.msra.mxu0 0.0
    %105 = vmatprep.subr.mxu0 0.0
    %106 = vmatpush2.msra.mxu0 0.0
    %107 = vmatprep.subr.mxu0 0.0
    %108 = vmatpush2.msra.mxu0 0.0
    %109 = vmatprep.subr.mxu0 0.0
    %110 = vmatpush2.msra.mxu0 0.0
    %111 = vmatprep.mubr.f32.mxu0 0.0
    %112 = vmatmul.mubr.f32.gmra.mxu0 %v45
    %v113 = vpop.f32.mrf.mxu0
    %v114 = vadd.f32 %v41, %v113
    %v115 = vpop.f32.mrf.mxu0
    %116 = vdwg.mxu0
    %v117 = vtanh.pop %v114
    %v118 = vld [vmem:[%s2] sm:$0xff]
    %vm119 = vcmask 64512
    %v121 = vsel %vm119, %v117, 0
    %123 = vmatprep.subr.mxu0 0.0
    %124 = vmatpush1.msra.mxu0 0.0
    %125 = vmatprep.subr.mxu0 0.0
    %126 = vmatpush1.msra.mxu0 0.0
    %127 = vmatprep.subr.mxu0 0.0
    %128 = vmatpush1.msra.mxu0 0.0
    %129 = vmatprep.subr.mxu0 0.0
    %130 = vmatpush1.msra.mxu0 0.0
    %131 = vmatprep.subr.mxu0 0.0
    %132 = vmatpush1.msra.mxu0 0.0
    %133 = vmatprep.subr.mxu0 0.0
    %134 = vmatpush1.msra.mxu0 0.0
    %135 = vmatprep.subr.mxu0 0.0
    %136 = vmatpush1.msra.mxu0 0.0
    %137 = vmatprep.subr.mxu0 0.0
    %138 = vmatpush1.msra.mxu0 0.0
    %139 = vmatprep.subr.mxu0 0.0
    %140 = vmatpush1.msra.mxu0 0.0
    %141 = vmatprep.subr.mxu0 0.0
    %142 = vmatpush1.msra.mxu0 0.0
    %143 = vmatprep.subr.mxu0 0.0
    %144 = vmatpush1.msra.mxu0 0.0
    %145 = vmatprep.subr.mxu0 0.0
    %146 = vmatpush1.msra.mxu0 0.0
    %147 = vmatprep.subr.mxu0 0.0
    %148 = vmatpush1.msra.mxu0 0.0
    %149 = vmatprep.subr.mxu0 0.0
    %150 = vmatpush1.msra.mxu0 0.0
    %151 = vmatprep.subr.mxu0 0.0
    %152 = vmatpush1.msra.mxu0 0.0
    %153 = vmatprep.subr.mxu0 0.0
    %154 = vmatpush1.msra.mxu0 %v118
    %155 = vmatprep.subr.mxu0 0.0
    %156 = vmatpush2.msra.mxu0 0.0
    %157 = vmatprep.subr.mxu0 0.0
    %158 = vmatpush2.msra.mxu0 0.0
    %159 = vmatprep.subr.mxu0 0.0
    %160 = vmatpush2.msra.mxu0 0.0
    %161 = vmatprep.subr.mxu0 0.0
    %162 = vmatpush2.msra.mxu0 0.0
    %163 = vmatprep.subr.mxu0 0.0
    %164 = vmatpush2.msra.mxu0 0.0
    %165 = vmatprep.subr.mxu0 0.0
    %166 = vmatpush2.msra.mxu0 0.0
    %167 = vmatprep.subr.mxu0 0.0
    %168 = vmatpush2.msra.mxu0 0.0
    %169 = vmatprep.subr.mxu0 0.0
    %170 = vmatpush2.msra.mxu0 0.0
    %171 = vmatprep.subr.mxu0 0.0
    %172 = vmatpush2.msra.mxu0 0.0
    %173 = vmatprep.subr.mxu0 0.0
    %174 = vmatpush2.msra.mxu0 0.0
    %175 = vmatprep.subr.mxu0 0.0
    %176 = vmatpush2.msra.mxu0 0.0
    %177 = vmatprep.subr.mxu0 0.0
    %178 = vmatpush2.msra.mxu0 0.0
    %179 = vmatprep.subr.mxu0 0.0
    %180 = vmatpush2.msra.mxu0 0.0
    %181 = vmatprep.subr.mxu0 0.0
    %182 = vmatpush2.msra.mxu0 0.0
    %183 = vmatprep.subr.mxu0 0.0
    %184 = vmatpush2.msra.mxu0 0.0
    %185 = vmatprep.subr.mxu0 0.0
    %186 = vmatpush2.msra.mxu0 0.0
    %187 = vmatprep.mubr.f32.mxu0 0.0
    %188 = vmatmul.mubr.f32.gmra.mxu0 %v121
    %v189 = vpop.f32.mrf.mxu0
    %v190 = vadd.f32 0.0, %v189
    %v191 = vpop.f32.mrf.mxu0
    %192 = vdwg.mxu0
    %v193 = vadd.f32 %v33, %v190
    %194 = vst.msk [vmem:[#allocation5] sm:$0xff] %vm43, %v193
    // Predicated region
    $region26: #{tpu_custom_call.1} parent=1 // pred_check
      _
    $region27: #{tpu_custom_call.1} parent=1 // pred_check_branch
      %196 = sbr.rel (0) target = $region29
    $region28: #{tpu_custom_call.1} parent=1 // pred_region
      %s198 = ssub.s32 128, 128
      %199 = vsyncadd [#allocation4], %s198
      %s201 = sshll.u32 [#allocation5], 4
      %s202 = int_to_ptr.vmem [resolvable:$true] %s201
      %204 = dma.vmem_to_hbm [thread:$0]  %s202, 128, %s5, [#allocation4]
    $region29: #{tpu_custom_call.1} parent=1 // pred_fallthru
      _
    // Predicated region
    $region30: #{tpu_custom_call.1} parent=1 // pred_check
      _
    $region31: #{tpu_custom_call.1} parent=1 // pred_check_branch
      %206 = sbr.rel (0) target = $region33
    $region32: #{tpu_custom_call.1} parent=1 // pred_region
      %207 = dma.done [#allocation4], 128
    $region33: #{tpu_custom_call.1} parent=1 // pred_fallthru
      _
    %208 = vsyncpa [#allocation3], 1
    %209 = vsyncpa [#allocation4], 1

</llo_original>
